<compile_context>
chip_gen: v7x
topology: tpu7x:2x2x1
jax: 0.10.0
libtpu: 0.0.40
codegen_flags: <defaults>
</compile_context>

<pallas_src>
import jax
import jax.numpy as jnp
from jax.experimental import pallas as pl
from jax.experimental.pallas import tpu as pltpu

_LANE = 128   # lane width (last dim)
_SUBLANE = 8  # f32 sublane group (second-to-last dim)


def _round_up(x, m):
    return ((x + m - 1) // m) * m


def mlp_kernel(x_ref, w1_ref, b1_ref, w2_ref, b2_ref, w3_ref, b3_ref, o_ref):
    # Cast the streamed x block to bf16 in-kernel (cheap VPU cast) so x is
    # streamed from HBM only once, in its original f32 form.
    x = x_ref[...].astype(jnp.bfloat16)
    # Layer 1: bf16 MXU matmul with f32 accumulation; bias + ReLU in f32.
    h = jnp.dot(x, w1_ref[...], preferred_element_type=jnp.float32)
    h = jnp.maximum(h + b1_ref[...], 0.0)
    # Layer 2: Linear + ReLU.
    h = jnp.dot(h.astype(jnp.bfloat16), w2_ref[...],
                preferred_element_type=jnp.float32)
    h = jnp.maximum(h + b2_ref[...], 0.0)
    # Layer 3: logits.  Output block is lane-dense (Cp multiple of 128), so
    # the final store is an unmasked full-lane vst.
    out = jnp.dot(h.astype(jnp.bfloat16), w3_ref[...],
                  preferred_element_type=jnp.float32)
    o_ref[...] = (out + b3_ref[...]).astype(o_ref.dtype)


def neural_net_forward(x, params, *, block_batch=512):
    """Forward pass of the 3-layer MLP.

    x: [B, input_size] f32.
    params: dict with w1/b1/w2/b2/w3/b3, weights stored as [in, out]
            (transposed vs. PyTorch's [out, in]) so the kernel computes x @ W + b.
    """
    w1, b1, w2, b2, w3, b3 = (
        params["w1"], params["b1"], params["w2"],
        params["b2"], params["w3"], params["b3"],
    )
    B, F = x.shape
    H = w1.shape[1]
    C = w3.shape[1]

    # Pad hidden / class dims to 128-lane multiples (MXU-friendly, lane-dense
    # output).  x's feature dim stays unpadded (block dim == full array dim is
    # legal) so x never takes an extra host-side pad pass.
    Hp = _round_up(max(H, _LANE), _LANE)
    Cp = _round_up(max(C, _LANE), _LANE)

    # --- batch tiling ------------------------------------------------------
    B8 = _round_up(B, _SUBLANE)
    TB = min(_round_up(max(block_batch, _SUBLANE), _SUBLANE), B8)
    if TB >= B8 and B8 >= 2 * _SUBLANE:
        # Whole batch fits in one tile: split into two tiles so the "parallel"
        # grid axis gives both v7x TensorCores work instead of idling one.
        TB = _round_up(pl.cdiv(B8, 2), _SUBLANE)

    # --- VMEM budget (generation-aware) -------------------------------------
    try:
        vmem_cap = pltpu.get_tpu_info().vmem_capacity_bytes
    except Exception:  # pragma: no cover - conservative fallback (v7x per-TC)
        vmem_cap = 64 << 20
    vmem_budget = int(vmem_cap * 0.8)  # ~20% headroom for Mosaic internals

    def per_step_bytes(tb):
        return (
            2 * tb * F * 4                           # x block f32, double-buffered
            + 2 * tb * Cp * 4                        # out block f32, double-buffered
            + (F * Hp + Hp * Hp + Hp * Cp) * 2       # bf16 weights, Buffered(1)
            + (2 * Hp + Cp) * 4                      # f32 biases, Buffered(1)
            + tb * Hp * (4 + 2)                      # live f32 hidden + bf16 cast copy
        )

    margin = 4 << 20
    while per_step_bytes(TB) + margin > vmem_budget and TB > _SUBLANE:
        TB = max(_SUBLANE, _round_up(TB // 2, _SUBLANE))
    # TODO(synk): if resident bf16 weights alone ever exceed the VMEM budget
    # (very large hidden sizes on v7x's 64 MiB), add a hidden-dim-tiled
    # fallback (second grid axis + f32 accumulator scratch with pl.when
    # init/finalize) instead of relying on spills.

    nb = pl.cdiv(B, TB)
    vmem_limit = min(_round_up(per_step_bytes(TB) + margin, 1 << 20), vmem_budget)

    # --- one-time (cheap) weight/bias padding; weights in bf16 --------------
    bf16, f32 = jnp.bfloat16, jnp.float32
    w1p = jnp.zeros((F, Hp), bf16).at[:, :H].set(w1.astype(bf16))
    b1p = jnp.zeros((1, Hp), f32).at[:, :H].set(jnp.reshape(b1, (1, H)).astype(f32))
    w2p = jnp.zeros((Hp, Hp), bf16).at[:H, :H].set(w2.astype(bf16))
    b2p = jnp.zeros((1, Hp), f32).at[:, :H].set(jnp.reshape(b2, (1, H)).astype(f32))
    w3p = jnp.zeros((Hp, Cp), bf16).at[:H, :C].set(w3.astype(bf16))
    b3p = jnp.zeros((1, Cp), f32).at[:, :C].set(jnp.reshape(b3, (1, C)).astype(f32))

    cost = pl.CostEstimate(
        flops=2 * B * (F * Hp + Hp * Hp + Hp * Cp),
        transcendentals=0,
        bytes_accessed=(B * F * 4 + B * Cp * 4
                        + (F * Hp + Hp * Hp + Hp * Cp) * 2
                        + (2 * Hp + Cp) * 4),
    )

    out_padded = pl.pallas_call(
        mlp_kernel,
        out_shape=jax.ShapeDtypeStruct((B, Cp), f32),
        grid=(nb,),
        in_specs=[
            # x streamed per batch tile (ragged last block handled by Pallas).
            pl.BlockSpec((TB, F), lambda i: (i, 0)),
            # Weights / biases: constant index_map -> single-buffered resident.
            pl.BlockSpec((F, Hp), lambda i: (0, 0), pipeline_mode=pl.Buffered(1)),
            pl.BlockSpec((1, Hp), lambda i: (0, 0), pipeline_mode=pl.Buffered(1)),
            pl.BlockSpec((Hp, Hp), lambda i: (0, 0), pipeline_mode=pl.Buffered(1)),
            pl.BlockSpec((1, Hp), lambda i: (0, 0), pipeline_mode=pl.Buffered(1)),
            pl.BlockSpec((Hp, Cp), lambda i: (0, 0), pipeline_mode=pl.Buffered(1)),
            pl.BlockSpec((1, Cp), lambda i: (0, 0), pipeline_mode=pl.Buffered(1)),
        ],
        out_specs=pl.BlockSpec((TB, Cp), lambda i: (i, 0)),
        compiler_params=pltpu.CompilerParams(
            dimension_semantics=("parallel",),
            vmem_limit_bytes=vmem_limit,
        ),
        cost_estimate=cost,
    )(x.astype(f32), w1p, b1p, w2p, b2p, w3p, b3p)

    # Slice the lane-padding off the class dim (cheap, last-dim slice only).
    return out_padded[:, :C]


def init_params(key, input_size, hidden_size, num_classes):
    """Deterministic init mirroring nn.Linear default: U(-1/sqrt(in), 1/sqrt(in))."""
    def linear_init(k, fan_in, fan_out):
        kw, kb = jax.random.split(k)
        bound = 1.0 / jnp.sqrt(fan_in)
        # stored as [in, out] so kernel does x @ W
        w = jax.random.uniform(kw, (fan_in, fan_out), jnp.float32, -bound, bound)
        b = jax.random.uniform(kb, (1, fan_out), jnp.float32, -bound, bound)
        return w, b

    k1, k2, k3 = jax.random.split(key, 3)
    w1, b1 = linear_init(k1, input_size, hidden_size)
    w2, b2 = linear_init(k2, hidden_size, hidden_size)
    w3, b3 = linear_init(k3, hidden_size, num_classes)
    return {"w1": w1, "b1": b1, "w2": w2, "b2": b2, "w3": w3, "b3": b3}


def reference_forward(x, p):
    h = jnp.maximum(x @ p["w1"] + p["b1"], 0.0)
    h = jnp.maximum(h @ p["w2"] + p["b2"], 0.0)
    return h @ p["w3"] + p["b3"]


if __name__ == "__main__":
    # Small but tiling-exercising shapes: batch=200 -> two tiles of 104 rows
    # (the second one ragged/masked); hidden/class dims pad to 128 lanes.
    input_size, hidden_size, num_classes = 32, 32, 10
    batch = 200

    key = jax.random.PRNGKey(0)
    kx, kp = jax.random.split(key)
    x = jax.random.normal(kx, (batch, input_size), dtype=jnp.float32)
    params = init_params(kp, input_size, hidden_size, num_classes)

    out = neural_net_forward(x, params)
    out = jax.block_until_ready(out)

    ref = reference_forward(x, params)
    assert out.shape == (batch, num_classes)
    # bf16 MXU operands (f32 accumulation) -> bf16-level tolerance vs f32 ref.
    max_err = float(jnp.max(jnp.abs(out - ref)))
    assert jnp.allclose(out, ref, atol=5e-2, rtol=5e-2), max_err

    print("KERNEL_OK")
</pallas_src>

<mosaic_0001>
module attributes {stable_mosaic.version = 11 : i64} {
  func.func @mlp_kernel(%arg0: i32, %arg1: memref<104x32xf32, #tpu.memory_space<vmem>>, %arg2: memref<32x128xbf16, #tpu.memory_space<vmem>>, %arg3: memref<1x128xf32, #tpu.memory_space<vmem>>, %arg4: memref<128x128xbf16, #tpu.memory_space<vmem>>, %arg5: memref<1x128xf32, #tpu.memory_space<vmem>>, %arg6: memref<128x128xbf16, #tpu.memory_space<vmem>>, %arg7: memref<1x128xf32, #tpu.memory_space<vmem>>, %arg8: memref<104x128xf32, #tpu.memory_space<vmem>>) attributes {dimension_semantics = [#tpu.dimension_semantics<parallel>], iteration_bounds = array<i64: 2>, scalar_prefetch = 0 : i64, scratch_operands = 0 : i64, tpu.core_type = #tpu.core_type<tc>, window_params = [{transform_indices = @transform_0, window_bounds = array<i64: 104, 32>}, {pipeline_mode = #tpu.pipeline_mode<synchronous>, transform_indices = @transform_1, window_bounds = array<i64: 32, 128>}, {pipeline_mode = #tpu.pipeline_mode<synchronous>, transform_indices = @transform_2, window_bounds = array<i64: 1, 128>}, {pipeline_mode = #tpu.pipeline_mode<synchronous>, transform_indices = @transform_3, window_bounds = array<i64: 128, 128>}, {pipeline_mode = #tpu.pipeline_mode<synchronous>, transform_indices = @transform_4, window_bounds = array<i64: 1, 128>}, {pipeline_mode = #tpu.pipeline_mode<synchronous>, transform_indices = @transform_5, window_bounds = array<i64: 128, 128>}, {pipeline_mode = #tpu.pipeline_mode<synchronous>, transform_indices = @transform_6, window_bounds = array<i64: 1, 128>}, {transform_indices = @transform_7, window_bounds = array<i64: 104, 128>}]} {
    %c0 = arith.constant 0 : index
    %c0_0 = arith.constant 0 : index
    %0 = vector.load %arg1[%c0, %c0_0] : memref<104x32xf32, #tpu.memory_space<vmem>>, vector<104x32xf32>
    %1 = arith.truncf %0 : vector<104x32xf32> to vector<104x32xbf16>
    %c0_1 = arith.constant 0 : index
    %c0_2 = arith.constant 0 : index
    %2 = vector.load %arg2[%c0_1, %c0_2] : memref<32x128xbf16, #tpu.memory_space<vmem>>, vector<32x128xbf16>
    %cst = arith.constant dense<0.000000e+00> : vector<104x128xf32>
    %3 = tpu.matmul %1, %2, %cst {dimension_numbers = #tpu.dot_dimension_numbers<[1], [0], [0], [1], [0, 0, 1, 1], [], []>} : vector<104x32xbf16>, vector<32x128xbf16>, vector<104x128xf32> -> vector<104x128xf32>
    %c0_3 = arith.constant 0 : index
    %c0_4 = arith.constant 0 : index
    %4 = vector.load %arg3[%c0_3, %c0_4] : memref<1x128xf32, #tpu.memory_space<vmem>>, vector<1x128xf32>
    %5 = vector.broadcast %4 : vector<1x128xf32> to vector<104x128xf32>
    %6 = arith.addf %3, %5 : vector<104x128xf32>
    %cst_5 = arith.constant 0.000000e+00 : f32
    %7 = vector.broadcast %cst_5 : f32 to vector<104x128xf32>
    %8 = arith.maximumf %6, %7 : vector<104x128xf32>
    %9 = arith.truncf %8 : vector<104x128xf32> to vector<104x128xbf16>
    %c0_6 = arith.constant 0 : index
    %c0_7 = arith.constant 0 : index
    %10 = vector.load %arg4[%c0_6, %c0_7] : memref<128x128xbf16, #tpu.memory_space<vmem>>, vector<128x128xbf16>
    %cst_8 = arith.constant dense<0.000000e+00> : vector<104x128xf32>
    %11 = tpu.matmul %9, %10, %cst_8 {dimension_numbers = #tpu.dot_dimension_numbers<[1], [0], [0], [1], [0, 0, 1, 1], [], []>} : vector<104x128xbf16>, vector<128x128xbf16>, vector<104x128xf32> -> vector<104x128xf32>
    %c0_9 = arith.constant 0 : index
    %c0_10 = arith.constant 0 : index
    %12 = vector.load %arg5[%c0_9, %c0_10] : memref<1x128xf32, #tpu.memory_space<vmem>>, vector<1x128xf32>
    %13 = vector.broadcast %12 : vector<1x128xf32> to vector<104x128xf32>
    %14 = arith.addf %11, %13 : vector<104x128xf32>
    %cst_11 = arith.constant 0.000000e+00 : f32
    %15 = vector.broadcast %cst_11 : f32 to vector<104x128xf32>
    %16 = arith.maximumf %14, %15 : vector<104x128xf32>
    %17 = arith.truncf %16 : vector<104x128xf32> to vector<104x128xbf16>
    %c0_12 = arith.constant 0 : index
    %c0_13 = arith.constant 0 : index
    %18 = vector.load %arg6[%c0_12, %c0_13] : memref<128x128xbf16, #tpu.memory_space<vmem>>, vector<128x128xbf16>
    %cst_14 = arith.constant dense<0.000000e+00> : vector<104x128xf32>
    %19 = tpu.matmul %17, %18, %cst_14 {dimension_numbers = #tpu.dot_dimension_numbers<[1], [0], [0], [1], [0, 0, 1, 1], [], []>} : vector<104x128xbf16>, vector<128x128xbf16>, vector<104x128xf32> -> vector<104x128xf32>
    %c0_15 = arith.constant 0 : index
    %c0_16 = arith.constant 0 : index
    %20 = vector.load %arg7[%c0_15, %c0_16] : memref<1x128xf32, #tpu.memory_space<vmem>>, vector<1x128xf32>
    %21 = vector.broadcast %20 : vector<1x128xf32> to vector<104x128xf32>
    %22 = arith.addf %19, %21 : vector<104x128xf32>
    %c0_17 = arith.constant 0 : index
    %c0_18 = arith.constant 0 : index
    %23 = vector.load %arg8[%c0_17, %c0_18] : memref<104x128xf32, #tpu.memory_space<vmem>>, vector<104x128xf32>
    tpu.vector_store %arg8[%c0_17, %c0_18], %22 {strides = array<i32>} : memref<104x128xf32, #tpu.memory_space<vmem>>, vector<104x128xf32>,
    return
  }
  func.func @transform_0(%arg0: i32) -> (i32, i32) {
    %c0_i32 = arith.constant 0 : i32
    %c0_i32_0 = arith.constant 0 : i32
    return %arg0, %c0_i32 : i32, i32
  }
  func.func @transform_1(%arg0: i32) -> (i32, i32) {
    %c0_i32 = arith.constant 0 : i32
    %c0_i32_0 = arith.constant 0 : i32
    %c0_i32_1 = arith.constant 0 : i32
    return %c0_i32, %c0_i32_0 : i32, i32
  }
  func.func @transform_2(%arg0: i32) -> (i32, i32) {
    %c0_i32 = arith.constant 0 : i32
    %c0_i32_0 = arith.constant 0 : i32
    %c0_i32_1 = arith.constant 0 : i32
    return %c0_i32, %c0_i32_0 : i32, i32
  }
  func.func @transform_3(%arg0: i32) -> (i32, i32) {
    %c0_i32 = arith.constant 0 : i32
    %c0_i32_0 = arith.constant 0 : i32
    %c0_i32_1 = arith.constant 0 : i32
    return %c0_i32, %c0_i32_0 : i32, i32
  }
  func.func @transform_4(%arg0: i32) -> (i32, i32) {
    %c0_i32 = arith.constant 0 : i32
    %c0_i32_0 = arith.constant 0 : i32
    %c0_i32_1 = arith.constant 0 : i32
    return %c0_i32, %c0_i32_0 : i32, i32
  }
  func.func @transform_5(%arg0: i32) -> (i32, i32) {
    %c0_i32 = arith.constant 0 : i32
    %c0_i32_0 = arith.constant 0 : i32
    %c0_i32_1 = arith.constant 0 : i32
    return %c0_i32, %c0_i32_0 : i32, i32
  }
  func.func @transform_6(%arg0: i32) -> (i32, i32) {
    %c0_i32 = arith.constant 0 : i32
    %c0_i32_0 = arith.constant 0 : i32
    %c0_i32_1 = arith.constant 0 : i32
    return %c0_i32, %c0_i32_0 : i32, i32
  }
  func.func @transform_7(%arg0: i32) -> (i32, i32) {
    %c0_i32 = arith.constant 0 : i32
    %c0_i32_0 = arith.constant 0 : i32
    return %arg0, %c0_i32 : i32, i32
  }
}

</mosaic_0001>

<llo_original>
// kernel: tpu_custom_call.1
$region0: #{tpu_custom_call.1}
  #allocation0 [shape = 'u32[]', space=smem, size = 0x4, offset = 0x4, fixed_abs, tag = 'smem constant byte address 0x4 - core index']
  #allocation1 [shape = 'u32[144,128]{1,0:T(1,128)}', space=vmem, size = 0x12000, scoped, tag = 'internal scratch']
  %s0 = inlined_call_operand.vmem [shape: f32[200,32], index: 0, kind: input, shape index: {}]
  %s1 = inlined_call_operand.vmem [shape: bf16[32,128], index: 1, kind: input, shape index: {}]
  %s2 = inlined_call_operand.vmem [shape: f32[1,128], index: 2, kind: input, shape index: {}]
  %s3 = inlined_call_operand.vmem [shape: bf16[128,128], index: 3, kind: input, shape index: {}]
  %s4 = inlined_call_operand.vmem [shape: f32[1,128], index: 4, kind: input, shape index: {}]
  %s5 = inlined_call_operand.vmem [shape: bf16[128,128], index: 5, kind: input, shape index: {}]
  %s6 = inlined_call_operand.vmem [shape: f32[1,128], index: 6, kind: input, shape index: {}]
  %s7 = inlined_call_operand.hbm [shape: f32[200,128], index: 7, kind: output, shape index: {}]
  %s8 = sld [smem:[#allocation0]]
  $region61: #{tpu_custom_call.1} parent=0
    _
  %s10 = ssub.s32 1, %s8
  %s11 = scalar_select 0, %s10, %s8
  $region1: #{tpu_custom_call.1} parent=0
    #allocation2 [shape = 'u8[106496]{0}', space=vmem, size = 0x1a000, scoped, tag = 'output window, operand 0']
    #allocation3 [shape = 's32[2]{0}', space=sflag, size = 0x8, scoped, tag = 'scoped memory for tpu_custom_call.1']
    %12 = vsyncpa [#allocation3], 0
    %s13 = scalar_lea.sflag [#allocation3], 1
    %14 = vsyncpa %s13, 0
    loop: start=0, step=1, limit=4
    $region2: #{tpu_custom_call.1} parent=1 // loop_pre_header
      _
    $region3: #{tpu_custom_call.1} parent=1 // loop_header
      %s16 = sphi 0, %s20
      %p17 = scmp.ge.s32.totalorder %s16, 4
      %s26 = sphi 0, %s28
      %s29 = sphi 0, %s26
      %s30 = sphi 0, %s29
      %s46 = sphi 0, %s30
      %s50 = sphi 0, %s50
      %s52 = sphi 0, %s50
      %s53 = sphi 0, %s52
      %s67 = sphi 0, %s53
      %s71 = sphi 0, %s71
      %s73 = sphi 0, %s71
      %s74 = sphi 0, %s73
      %s88 = sphi 0, %s74
      %s92 = sphi 0, %s92
      %s94 = sphi 0, %s92
      %s95 = sphi 0, %s94
      %s109 = sphi 0, %s95
      %s113 = sphi 0, %s113
      %s115 = sphi 0, %s113
      %s116 = sphi 0, %s115
      %s130 = sphi 0, %s116
      %s134 = sphi 0, %s134
      %s136 = sphi 0, %s134
      %s137 = sphi 0, %s136
      %s151 = sphi 0, %s137
      %s155 = sphi 0, %s155
      %s157 = sphi 0, %s155
      %s158 = sphi 0, %s157
      %s172 = sphi 0, %s158
      %s178 = sphi 0, %s180
      %s181 = sphi 0, %s178
      %s182 = sphi 0, %s181
      %s198 = sphi 0, %s182
    $region4: #{tpu_custom_call.1} parent=1 // loop_header_branch
      %19 = sbr.rel (%p17) target = $region8
    $region5: #{tpu_custom_call.1} parent=1 // loop_body
      %s21 = ssub.s32 %s16, 1
      %s22 = ssub.s32 %s16, 2
      %s23 = sadd.s32 %s16, 1
      %s24 = ssub.s32 %s16, %s23
      %p25 = scmp.eq.s32.totalorder %s24, 0
      %s27 = sadd.s32 %s26, 1
      %s28 = scalar_select %p25, %s26, %s27
      %p31 = pneg %p25
      %p32 = scmp.eq.s32.totalorder %s16, 1
      %p33 = por %p31, %p32
      %p34 = scmp.ne.s32.totalorder %s26, %s29
      %p35 = scmp.eq.s32.totalorder %s16, 0
      %p36 = por %p34, %p35
      %p37 = scmp.ne.s32.totalorder %s26, %s29
      %p38 = scmp.eq.s32.totalorder %s21, 1
      %p39 = por %p37, %p38
      %p40 = scmp.ne.s32.totalorder %s29, %s30
      %p41 = scmp.eq.s32.totalorder %s21, 0
      %p42 = por %p40, %p41
      %p43 = scmp.ne.s32.totalorder %s29, %s30
      %p44 = scmp.eq.s32.totalorder %s22, 1
      %p45 = por %p43, %p44
      %p47 = scmp.ne.s32.totalorder %s30, %s46
      %p48 = scmp.eq.s32.totalorder %s22, 0
      %p49 = por %p47, %p48
      %s51 = sadd.s32 %s50, 1
      %p54 = scmp.eq.s32.totalorder %s16, 1
      %p55 = scmp.ne.s32.totalorder %s50, %s52
      %p56 = scmp.eq.s32.totalorder %s16, 0
      %p57 = por %p55, %p56
      %p58 = scmp.ne.s32.totalorder %s50, %s52
      %p59 = scmp.eq.s32.totalorder %s21, 1
      %p60 = por %p58, %p59
      %p61 = scmp.ne.s32.totalorder %s52, %s53
      %p62 = scmp.eq.s32.totalorder %s21, 0
      %p63 = por %p61, %p62
      %p64 = scmp.ne.s32.totalorder %s52, %s53
      %p65 = scmp.eq.s32.totalorder %s22, 1
      %p66 = por %p64, %p65
      %p68 = scmp.ne.s32.totalorder %s53, %s67
      %p69 = scmp.eq.s32.totalorder %s22, 0
      %p70 = por %p68, %p69
      %s72 = sadd.s32 %s71, 1
      %p75 = scmp.eq.s32.totalorder %s16, 1
      %p76 = scmp.ne.s32.totalorder %s71, %s73
      %p77 = scmp.eq.s32.totalorder %s16, 0
      %p78 = por %p76, %p77
      %p79 = scmp.ne.s32.totalorder %s71, %s73
      %p80 = scmp.eq.s32.totalorder %s21, 1
      %p81 = por %p79, %p80
      %p82 = scmp.ne.s32.totalorder %s73, %s74
      %p83 = scmp.eq.s32.totalorder %s21, 0
      %p84 = por %p82, %p83
      %p85 = scmp.ne.s32.totalorder %s73, %s74
      %p86 = scmp.eq.s32.totalorder %s22, 1
      %p87 = por %p85, %p86
      %p89 = scmp.ne.s32.totalorder %s74, %s88
      %p90 = scmp.eq.s32.totalorder %s22, 0
      %p91 = por %p89, %p90
      %s93 = sadd.s32 %s92, 1
      %p96 = scmp.eq.s32.totalorder %s16, 1
      %p97 = scmp.ne.s32.totalorder %s92, %s94
      %p98 = scmp.eq.s32.totalorder %s16, 0
      %p99 = por %p97, %p98
      %p100 = scmp.ne.s32.totalorder %s92, %s94
      %p101 = scmp.eq.s32.totalorder %s21, 1
      %p102 = por %p100, %p101
      %p103 = scmp.ne.s32.totalorder %s94, %s95
      %p104 = scmp.eq.s32.totalorder %s21, 0
      %p105 = por %p103, %p104
      %p106 = scmp.ne.s32.totalorder %s94, %s95
      %p107 = scmp.eq.s32.totalorder %s22, 1
      %p108 = por %p106, %p107
      %p110 = scmp.ne.s32.totalorder %s95, %s109
      %p111 = scmp.eq.s32.totalorder %s22, 0
      %p112 = por %p110, %p111
      %s114 = sadd.s32 %s113, 1
      %p117 = scmp.eq.s32.totalorder %s16, 1
      %p118 = scmp.ne.s32.totalorder %s113, %s115
      %p119 = scmp.eq.s32.totalorder %s16, 0
      %p120 = por %p118, %p119
      %p121 = scmp.ne.s32.totalorder %s113, %s115
      %p122 = scmp.eq.s32.totalorder %s21, 1
      %p123 = por %p121, %p122
      %p124 = scmp.ne.s32.totalorder %s115, %s116
      %p125 = scmp.eq.s32.totalorder %s21, 0
      %p126 = por %p124, %p125
      %p127 = scmp.ne.s32.totalorder %s115, %s116
      %p128 = scmp.eq.s32.totalorder %s22, 1
      %p129 = por %p127, %p128
      %p131 = scmp.ne.s32.totalorder %s116, %s130
      %p132 = scmp.eq.s32.totalorder %s22, 0
      %p133 = por %p131, %p132
      %s135 = sadd.s32 %s134, 1
      %p138 = scmp.eq.s32.totalorder %s16, 1
      %p139 = scmp.ne.s32.totalorder %s134, %s136
      %p140 = scmp.eq.s32.totalorder %s16, 0
      %p141 = por %p139, %p140
      %p142 = scmp.ne.s32.totalorder %s134, %s136
      %p143 = scmp.eq.s32.totalorder %s21, 1
      %p144 = por %p142, %p143
      %p145 = scmp.ne.s32.totalorder %s136, %s137
      %p146 = scmp.eq.s32.totalorder %s21, 0
      %p147 = por %p145, %p146
      %p148 = scmp.ne.s32.totalorder %s136, %s137
      %p149 = scmp.eq.s32.totalorder %s22, 1
      %p150 = por %p148, %p149
      %p152 = scmp.ne.s32.totalorder %s137, %s151
      %p153 = scmp.eq.s32.totalorder %s22, 0
      %p154 = por %p152, %p153
      %s156 = sadd.s32 %s155, 1
      %p159 = scmp.eq.s32.totalorder %s16, 1
      %p160 = scmp.ne.s32.totalorder %s155, %s157
      %p161 = scmp.eq.s32.totalorder %s16, 0
      %p162 = por %p160, %p161
      %p163 = scmp.ne.s32.totalorder %s155, %s157
      %p164 = scmp.eq.s32.totalorder %s21, 1
      %p165 = por %p163, %p164
      %p166 = scmp.ne.s32.totalorder %s157, %s158
      %p167 = scmp.eq.s32.totalorder %s21, 0
      %p168 = por %p166, %p167
      %p169 = scmp.ne.s32.totalorder %s157, %s158
      %p170 = scmp.eq.s32.totalorder %s22, 1
      %p171 = por %p169, %p170
      %p173 = scmp.ne.s32.totalorder %s158, %s172
      %p174 = scmp.eq.s32.totalorder %s22, 0
      %p175 = por %p173, %p174
      %s176 = ssub.s32 %s16, %s23
      %p177 = scmp.eq.s32.totalorder %s176, 0
      %s179 = sadd.s32 %s178, 1
      %s180 = scalar_select %p177, %s178, %s179
      %p183 = pneg %p177
      %p184 = scmp.eq.s32.totalorder %s16, 1
      %p185 = por %p183, %p184
      %p186 = scmp.ne.s32.totalorder %s178, %s181
      %p187 = scmp.eq.s32.totalorder %s16, 0
      %p188 = por %p186, %p187
      %p189 = scmp.ne.s32.totalorder %s178, %s181
      %p190 = scmp.eq.s32.totalorder %s21, 1
      %p191 = por %p189, %p190
      %p192 = scmp.ne.s32.totalorder %s181, %s182
      %p193 = scmp.eq.s32.totalorder %s21, 0
      %p194 = por %p192, %p193
      %p195 = scmp.ne.s32.totalorder %s181, %s182
      %p196 = scmp.eq.s32.totalorder %s22, 1
      %p197 = por %p195, %p196
      %p199 = scmp.ne.s32.totalorder %s182, %s198
      %p200 = scmp.eq.s32.totalorder %s22, 0
      %p201 = por %p199, %p200
      %p202 = scmp.le.s32.totalorder 1, %s16
      %p203 = scmp.lt.s32.totalorder %s16, 3
      %p204 = pnand %p202, %p203
      %p205 = pneg %p204
      // Predicated region
      $region9: #{tpu_custom_call.1} parent=5 // pred_check
        _
      $region10: #{tpu_custom_call.1} parent=5 // pred_check_branch
        %207 = sbr.rel (%p204) target = $region12
      $region11: #{tpu_custom_call.1} parent=5 // pred_region
        %s208 = ssub.s32 %s16, 1
        // Predicated region
        $region13: #{tpu_custom_call.1} parent=11 // pred_check
          %p209 = pneg %p63
        $region14: #{tpu_custom_call.1} parent=11 // pred_check_branch
          %211 = sbr.rel (%p209) target = $region16
        $region15: #{tpu_custom_call.1} parent=11 // pred_region
          _
        $region16: #{tpu_custom_call.1} parent=11 // pred_fallthru
          _
        // Predicated region
        $region17: #{tpu_custom_call.1} parent=11 // pred_check
          %p212 = pneg %p84
        $region18: #{tpu_custom_call.1} parent=11 // pred_check_branch
          %214 = sbr.rel (%p212) target = $region20
        $region19: #{tpu_custom_call.1} parent=11 // pred_region
          _
        $region20: #{tpu_custom_call.1} parent=11 // pred_fallthru
          _
        // Predicated region
        $region21: #{tpu_custom_call.1} parent=11 // pred_check
          %p215 = pneg %p105
        $region22: #{tpu_custom_call.1} parent=11 // pred_check_branch
          %217 = sbr.rel (%p215) target = $region24
        $region23: #{tpu_custom_call.1} parent=11 // pred_region
          _
        $region24: #{tpu_custom_call.1} parent=11 // pred_fallthru
          _
        // Predicated region
        $region25: #{tpu_custom_call.1} parent=11 // pred_check
          %p218 = pneg %p126
        $region26: #{tpu_custom_call.1} parent=11 // pred_check_branch
          %220 = sbr.rel (%p218) target = $region28
        $region27: #{tpu_custom_call.1} parent=11 // pred_region
          _
        $region28: #{tpu_custom_call.1} parent=11 // pred_fallthru
          _
        // Predicated region
        $region29: #{tpu_custom_call.1} parent=11 // pred_check
          %p221 = pneg %p147
        $region30: #{tpu_custom_call.1} parent=11 // pred_check_branch
          %223 = sbr.rel (%p221) target = $region32
        $region31: #{tpu_custom_call.1} parent=11 // pred_region
          _
        $region32: #{tpu_custom_call.1} parent=11 // pred_fallthru
          _
        // Predicated region
        $region33: #{tpu_custom_call.1} parent=11 // pred_check
          %p224 = pneg %p168
        $region34: #{tpu_custom_call.1} parent=11 // pred_check_branch
          %226 = sbr.rel (%p224) target = $region36
        $region35: #{tpu_custom_call.1} parent=11 // pred_region
          _
        $region36: #{tpu_custom_call.1} parent=11 // pred_fallthru
          _
      $region12: #{tpu_custom_call.1} parent=5 // pred_fallthru
        _
      %p227 = scmp.lt.s32.totalorder %s16, 2
      // Predicated region
      $region37: #{tpu_custom_call.1} parent=5 // pred_check
        %p228 = pneg %p227
      $region38: #{tpu_custom_call.1} parent=5 // pred_check_branch
        %230 = sbr.rel (%p228) target = $region40
      $region39: #{tpu_custom_call.1} parent=5 // pred_region
        // Predicated region
        $region41: #{tpu_custom_call.1} parent=39 // pred_check
          %p231 = pneg %p36
        $region42: #{tpu_custom_call.1} parent=39 // pred_check_branch
          %233 = sbr.rel (%p231) target = $region44
        $region43: #{tpu_custom_call.1} parent=39 // pred_region
          %s234 = smul.u32 13, %s16
          %s235 = ssub.s32 25, %s234
          %p236 = scmp.lt.s32.totalorder %s235, 13
          %s237 = scalar_select %p236, %s235, 13
          %s238 = smul.u32 128, %s237
          %p239 = scmp.lt.s32.totalorder %s234, 24
          %s240 = scalar_select %p239, %s234, 24
          %s241 = smul.addr %s240, 8
          %s242 = scalar_lea.vmem %s0, %s241
          %s243 = smul.u32 13, %s16
          %s244 = ssub.s32 25, %s243
          %p245 = scmp.lt.s32.totalorder %s244, 13
          %s246 = scalar_select %p245, %s244, 13
          %s247 = smul.u32 128, %s246
        $region44: #{tpu_custom_call.1} parent=39 // pred_fallthru
          _
      $region40: #{tpu_custom_call.1} parent=5 // pred_fallthru
        _
      %p248 = scmp.le.s32.totalorder 1, %s16
      %p249 = scmp.lt.s32.totalorder %s16, 3
      %p250 = pnand %p248, %p249
      %p251 = pneg %p250
      // Predicated region
      $region45: #{tpu_custom_call.1} parent=5 // pred_check
        _
      $region46: #{tpu_custom_call.1} parent=5 // pred_check_branch
        %253 = sbr.rel (%p250) target = $region48
      $region47: #{tpu_custom_call.1} parent=5 // pred_region
        %s254 = ssub.s32 %s16, 1
        %s255 = smul.u32 13, %s21
        %s256 = ssub.s32 25, %s255
        %p257 = scmp.lt.s32.totalorder %s256, 13
        %s258 = scalar_select %p257, %s256, 13
        %s259 = smul.u32 128, %s258
        %p260 = scmp.lt.s32.totalorder %s255, 24
        %s261 = scalar_select %p260, %s255, 24
        %s262 = smul.addr %s261, 8
        %s263 = scalar_lea.vmem %s0, %s262
        %p264 = pneg %p42
        %p265 = pneg %p39
        %p266 = pneg %p63
        %p267 = pneg %p60
        %p268 = pneg %p84
        %p269 = pneg %p81
        %p270 = pneg %p105
        %p271 = pneg %p102
        %p272 = pneg %p126
        %p273 = pneg %p123
        %p274 = pneg %p147
        %p275 = pneg %p144
        %p276 = pneg %p168
        %p277 = pneg %p165
        %p278 = pneg %p194
        %p279 = pneg %p191
        %s280 = sand.u32 %s181, 1
        %s281 = scalar_lea.sflag [#allocation3], %s280
        %s282 = sand.u32 %s181, 1
        %s283 = smul.addr %s282, 104
        %s284 = scalar_lea.vmem [#allocation2], %s283
        %s285 = smul.u32 13, %s21
        %s286 = ssub.s32 25, %s285
        %p287 = scmp.lt.s32.totalorder %s286, 13
        %s288 = scalar_select %p287, %s286, 13
        %s289 = smul.u32 128, %s288
        %p290 = scmp.lt.s32.totalorder %s285, 24
        %s291 = scalar_select %p290, %s285, 24
        %s292 = smul.addr %s291, 8
        %s293 = scalar_lea.vmem %s0, %s292
        %s294 = smul.u32 13, %s21
        %s295 = ssub.s32 25, %s294
        %p296 = scmp.lt.s32.totalorder %s295, 13
        %s297 = scalar_select %p296, %s295, 13
        %s298 = smul.u32 128, %s297
        %s299 = smul.u32 13, %s21
        %s300 = ssub.s32 25, %s299
        %p301 = scmp.lt.s32.totalorder %s300, 13
        %s302 = scalar_select %p301, %s300, 13
        %s303 = smul.u32 128, %s302
        %v305 = vld [vmem:[%s293] sm:$0xff]
        %v306 = vld [vmem:[%s293 + $0x8] sm:$0xff]
        %v307 = vld [vmem:[%s293 + $0x10] sm:$0xff]
        %v308 = vld [vmem:[%s293 + $0x18] sm:$0xff]
        %v309 = vld [vmem:[%s293 + $0x20] sm:$0xff]
        %v310 = vld [vmem:[%s293 + $0x28] sm:$0xff]
        %v311 = vld [vmem:[%s293 + $0x30] sm:$0xff]
        %v312 = vld [vmem:[%s293 + $0x38] sm:$0xff]
        %v313 = vld [vmem:[%s293 + $0x40] sm:$0xff]
        %v314 = vld [vmem:[%s293 + $0x48] sm:$0xff]
        %v315 = vld [vmem:[%s293 + $0x50] sm:$0xff]
        %v316 = vld [vmem:[%s293 + $0x58] sm:$0xff]
        %v317 = vld [vmem:[%s293 + $0x60] sm:$0xff]
        %v318 = vpack.c.bf16 %v306, %v305
        %v319 = vpack.c.bf16 %v308, %v307
        %v320 = vpack.c.bf16 %v310, %v309
        %v321 = vpack.c.bf16 %v312, %v311
        %v322 = vpack.c.bf16 %v314, %v313
        %v323 = vpack.c.bf16 %v316, %v315
        %v324 = vpack.c.bf16 %v317, %v317
        %v325 = vld [vmem:[%s1] sm:$0xf]
        %v326 = vld [vmem:[%s1 + $0x4] sm:$0xf]
        %v327 = vld [vmem:[%s1 + $0x8] sm:$0xf]
        %v328 = vld [vmem:[%s1 + $0xc] sm:$0xf]
        %v329 = vld [vmem:[%s2] sm:$0x1]
        %v331 = vlaneseq
        %v332 = vshrl.u32 %v331, 7
        %v333 = vsub.s32 0, %v332
        %v334 = vrot.slane %v329, %v333
        %v340 = vunpack.c.l.b16 %v325
        %v341 = vunpack.c.l.b16 %v326
        %v342 = vunpack.c.l.b16 %v327
        %v343 = vunpack.c.l.b16 %v328
        %v344 = vpack.c.b16 %v341, %v340
        %v345 = vpack.c.b16 %v343, %v342
        %vm348 = vcmask 261120
        %v350 = vsel %vm348, %v318, 0
        %v353 = vsel %vm348, %v319, 0
        %v356 = vsel %vm348, %v320, 0
        %v359 = vsel %vm348, %v321, 0
        %v362 = vsel %vm348, %v322, 0
        %v365 = vsel %vm348, %v323, 0
        %v368 = vsel %vm348, %v324, 0
        %370 = vmatprep.subr.bf16.mxu0 0
        %371 = vmatpush1.bf16.msra.mxu0 %v344
        %372 = vmatprep.subr.bf16.mxu0 0
        %373 = vmatpush1.bf16.msra.mxu0 %v345
        %374 = vmatprep.subr.bf16.mxu0 0
        %375 = vmatpush1.bf16.msra.mxu0 0
        %376 = vmatprep.subr.bf16.mxu0 0
        %377 = vmatpush1.bf16.msra.mxu0 0
        %378 = vmatprep.subr.bf16.mxu0 0
        %379 = vmatpush1.bf16.msra.mxu0 0
        %380 = vmatprep.subr.bf16.mxu0 0
        %381 = vmatpush1.bf16.msra.mxu0 0
        %382 = vmatprep.subr.bf16.mxu0 0
        %383 = vmatpush1.bf16.msra.mxu0 0
        %384 = vmatprep.subr.bf16.mxu0 0
        %385 = vmatpush1.bf16.msra.mxu0 0
        %386 = vmatprep.subr.bf16.mxu0 0
        %387 = vmatpush1.bf16.msra.mxu0 0
        %388 = vmatprep.subr.bf16.mxu0 0
        %389 = vmatpush1.bf16.msra.mxu0 0
        %390 = vmatprep.subr.bf16.mxu0 0
        %391 = vmatpush1.bf16.msra.mxu0 0
        %392 = vmatprep.subr.bf16.mxu0 0
        %393 = vmatpush1.bf16.msra.mxu0 0
        %394 = vmatprep.subr.bf16.mxu0 0
        %395 = vmatpush1.bf16.msra.mxu0 0
        %396 = vmatprep.subr.bf16.mxu0 0
        %397 = vmatpush1.bf16.msra.mxu0 0
        %398 = vmatprep.subr.bf16.mxu0 0
        %399 = vmatpush1.bf16.msra.mxu0 0
        %400 = vmatprep.subr.bf16.mxu0 0
        %401 = vmatpush1.bf16.msra.mxu0 0
        %402 = vmatprep.mubr.bf16.mxu0 0
        %403 = vmatmul.mubr.bf16.gmra.mrb[0].mxu0 %v350
        %v404 = vpop.f32.mrb[0].mxu0
        %v405 = vadd.f32 %v334, %v404
        %v406 = vpop.f32.mrb[0].mxu0
        %v407 = vpop.f32.mrb[0].mxu0
        %v408 = vadd.f32 %v334, %v407
        %v409 = vpop.f32.mrb[0].mxu0
        %410 = vmatprep.mubr.bf16.mxu0 0
        %411 = vmatmul.mubr.bf16.gmra.mrb[0].mxu0 %v353
        %v412 = vpop.f32.mrb[0].mxu0
        %v413 = vadd.f32 %v334, %v412
        %v414 = vpop.f32.mrb[0].mxu0
        %v415 = vpop.f32.mrb[0].mxu0
        %v416 = vadd.f32 %v334, %v415
        %v417 = vpop.f32.mrb[0].mxu0
        %418 = vmatprep.mubr.bf16.mxu0 0
        %419 = vmatmul.mubr.bf16.gmra.mrb[0].mxu0 %v356
        %v420 = vpop.f32.mrb[0].mxu0
        %v421 = vadd.f32 %v334, %v420
        %v422 = vpop.f32.mrb[0].mxu0
        %v423 = vpop.f32.mrb[0].mxu0
        %v424 = vadd.f32 %v334, %v423
        %v425 = vpop.f32.mrb[0].mxu0
        %426 = vmatprep.mubr.bf16.mxu0 0
        %427 = vmatmul.mubr.bf16.gmra.mrb[0].mxu0 %v359
        %v428 = vpop.f32.mrb[0].mxu0
        %v429 = vadd.f32 %v334, %v428
        %v430 = vpop.f32.mrb[0].mxu0
        %v431 = vpop.f32.mrb[0].mxu0
        %v432 = vadd.f32 %v334, %v431
        %v433 = vpop.f32.mrb[0].mxu0
        %434 = vmatprep.mubr.bf16.mxu0 0
        %435 = vmatmul.mubr.bf16.gmra.mrb[0].mxu0 %v362
        %v436 = vpop.f32.mrb[0].mxu0
        %v437 = vadd.f32 %v334, %v436
        %v438 = vpop.f32.mrb[0].mxu0
        %v439 = vpop.f32.mrb[0].mxu0
        %v440 = vadd.f32 %v334, %v439
        %v441 = vpop.f32.mrb[0].mxu0
        %442 = vmatprep.mubr.bf16.mxu0 0
        %443 = vmatmul.mubr.bf16.gmra.mrb[0].mxu0 %v365
        %v444 = vpop.f32.mrb[0].mxu0
        %v445 = vadd.f32 %v334, %v444
        %v446 = vpop.f32.mrb[0].mxu0
        %v447 = vpop.f32.mrb[0].mxu0
        %v448 = vadd.f32 %v334, %v447
        %v449 = vpop.f32.mrb[0].mxu0
        %450 = vmatprep.mubr.bf16.mxu0 0
        %451 = vmatmul.mubr.bf16.gmra.mrb[0].mxu0 %v368
        %v452 = vpop.f32.mrb[0].mxu0
        %v453 = vadd.f32 %v334, %v452
        %v454 = vpop.f32.mrb[0].mxu0
        %v455 = vpop.f32.mrb[0].mxu0
        %v456 = vpop.f32.mrb[0].mxu0
        %457 = vdwg.mxu0
        %v458 = vmax.f32 %v405, 0.0
        %v459 = vmax.f32 %v408, 0.0
        %v460 = vmax.f32 %v413, 0.0
        %v461 = vmax.f32 %v416, 0.0
        %v462 = vmax.f32 %v421, 0.0
        %v463 = vmax.f32 %v424, 0.0
        %v464 = vmax.f32 %v429, 0.0
        %v465 = vmax.f32 %v432, 0.0
        %v466 = vmax.f32 %v437, 0.0
        %v467 = vmax.f32 %v440, 0.0
        %v468 = vmax.f32 %v445, 0.0
        %v469 = vmax.f32 %v448, 0.0
        %v470 = vmax.f32 %v453, 0.0
        %v471 = vpack.c.bf16 %v459, %v458
        %v472 = vpack.c.bf16 %v461, %v460
        %v473 = vpack.c.bf16 %v463, %v462
        %v474 = vpack.c.bf16 %v465, %v464
        %v475 = vpack.c.bf16 %v467, %v466
        %v476 = vpack.c.bf16 %v469, %v468
        %v477 = vpack.c.bf16 %v470, %v470
        %v478 = vld [vmem:[%s3] sm:$0xf]
        %v479 = vld [vmem:[%s3 + $0x4] sm:$0xf]
        %v480 = vld [vmem:[%s3 + $0x8] sm:$0xf]
        %v481 = vld [vmem:[%s3 + $0xc] sm:$0xf]
        %v482 = vld [vmem:[%s3 + $0x10] sm:$0xf]
        %v483 = vld [vmem:[%s3 + $0x14] sm:$0xf]
        %v484 = vld [vmem:[%s3 + $0x18] sm:$0xf]
        %v485 = vld [vmem:[%s3 + $0x1c] sm:$0xf]
        %v486 = vld [vmem:[%s3 + $0x20] sm:$0xf]
        %v487 = vld [vmem:[%s3 + $0x24] sm:$0xf]
        %v488 = vld [vmem:[%s3 + $0x28] sm:$0xf]
        %v489 = vld [vmem:[%s3 + $0x2c] sm:$0xf]
        %v490 = vld [vmem:[%s3 + $0x30] sm:$0xf]
        %v491 = vld [vmem:[%s3 + $0x34] sm:$0xf]
        %v492 = vld [vmem:[%s3 + $0x38] sm:$0xf]
        %v493 = vld [vmem:[%s3 + $0x3c] sm:$0xf]
        %v494 = vld [vmem:[%s4] sm:$0x1]
        %v496 = vlaneseq
        %v497 = vshrl.u32 %v496, 7
        %v498 = vsub.s32 0, %v497
        %v499 = vrot.slane %v494, %v498
        %v517 = vunpack.c.l.b16 %v478
        %v518 = vunpack.c.l.b16 %v479
        %v519 = vunpack.c.l.b16 %v480
        %v520 = vunpack.c.l.b16 %v481
        %v521 = vunpack.c.l.b16 %v482
        %v522 = vunpack.c.l.b16 %v483
        %v523 = vunpack.c.l.b16 %v484
        %v524 = vunpack.c.l.b16 %v485
        %v525 = vunpack.c.l.b16 %v486
        %v526 = vunpack.c.l.b16 %v487
        %v527 = vunpack.c.l.b16 %v488
        %v528 = vunpack.c.l.b16 %v489
        %v529 = vunpack.c.l.b16 %v490
        %v530 = vunpack.c.l.b16 %v491
        %v531 = vunpack.c.l.b16 %v492
        %v532 = vunpack.c.l.b16 %v493
        %v533 = vpack.c.b16 %v518, %v517
        %v534 = vpack.c.b16 %v520, %v519
        %v535 = vpack.c.b16 %v522, %v521
        %v536 = vpack.c.b16 %v524, %v523
        %v537 = vpack.c.b16 %v526, %v525
        %v538 = vpack.c.b16 %v528, %v527
        %v539 = vpack.c.b16 %v530, %v529
        %v540 = vpack.c.b16 %v532, %v531
        %549 = vmatprep.subr.bf16.mxu0 0
        %550 = vmatpush1.bf16.msra.mxu0 %v533
        %551 = vmatprep.subr.bf16.mxu0 0
        %552 = vmatpush1.bf16.msra.mxu0 %v534
        %553 = vmatprep.subr.bf16.mxu0 0
        %554 = vmatpush1.bf16.msra.mxu0 %v535
        %555 = vmatprep.subr.bf16.mxu0 0
        %556 = vmatpush1.bf16.msra.mxu0 %v536
        %557 = vmatprep.subr.bf16.mxu0 0
        %558 = vmatpush1.bf16.msra.mxu0 %v537
        %559 = vmatprep.subr.bf16.mxu0 0
        %560 = vmatpush1.bf16.msra.mxu0 %v538
        %561 = vmatprep.subr.bf16.mxu0 0
        %562 = vmatpush1.bf16.msra.mxu0 %v539
        %563 = vmatprep.subr.bf16.mxu0 0
        %564 = vmatpush1.bf16.msra.mxu0 %v540
        %565 = vmatprep.subr.bf16.mxu0 0
        %566 = vmatpush1.bf16.msra.mxu0 0
        %567 = vmatprep.subr.bf16.mxu0 0
        %568 = vmatpush1.bf16.msra.mxu0 0
        %569 = vmatprep.subr.bf16.mxu0 0
        %570 = vmatpush1.bf16.msra.mxu0 0
        %571 = vmatprep.subr.bf16.mxu0 0
        %572 = vmatpush1.bf16.msra.mxu0 0
        %573 = vmatprep.subr.bf16.mxu0 0
        %574 = vmatpush1.bf16.msra.mxu0 0
        %575 = vmatprep.subr.bf16.mxu0 0
        %576 = vmatpush1.bf16.msra.mxu0 0
        %577 = vmatprep.subr.bf16.mxu0 0
        %578 = vmatpush1.bf16.msra.mxu0 0
        %579 = vmatprep.subr.bf16.mxu0 0
        %580 = vmatpush1.bf16.msra.mxu0 0
        %581 = vmatprep.mubr.bf16.mxu0 0
        %582 = vmatmul.mubr.bf16.gmra.mrb[0].mxu0 %v471
        %v583 = vpop.f32.mrb[0].mxu0
        %v584 = vadd.f32 %v499, %v583
        %v585 = vpop.f32.mrb[0].mxu0
        %v586 = vpop.f32.mrb[0].mxu0
        %v587 = vadd.f32 %v499, %v586
        %v588 = vpop.f32.mrb[0].mxu0
        %589 = vmatprep.mubr.bf16.mxu0 0
        %590 = vmatmul.mubr.bf16.gmra.mrb[0].mxu0 %v472
        %v591 = vpop.f32.mrb[0].mxu0
        %v592 = vadd.f32 %v499, %v591
        %v593 = vpop.f32.mrb[0].mxu0
        %v594 = vpop.f32.mrb[0].mxu0
        %v595 = vadd.f32 %v499, %v594
        %v596 = vpop.f32.mrb[0].mxu0
        %597 = vmatprep.mubr.bf16.mxu0 0
        %598 = vmatmul.mubr.bf16.gmra.mrb[0].mxu0 %v473
        %v599 = vpop.f32.mrb[0].mxu0
        %v600 = vadd.f32 %v499, %v599
        %v601 = vpop.f32.mrb[0].mxu0
        %v602 = vpop.f32.mrb[0].mxu0
        %v603 = vadd.f32 %v499, %v602
        %v604 = vpop.f32.mrb[0].mxu0
        %605 = vmatprep.mubr.bf16.mxu0 0
        %606 = vmatmul.mubr.bf16.gmra.mrb[0].mxu0 %v474
        %v607 = vpop.f32.mrb[0].mxu0
        %v608 = vadd.f32 %v499, %v607
        %v609 = vpop.f32.mrb[0].mxu0
        %v610 = vpop.f32.mrb[0].mxu0
        %v611 = vadd.f32 %v499, %v610
        %v612 = vpop.f32.mrb[0].mxu0
        %613 = vmatprep.mubr.bf16.mxu0 0
        %614 = vmatmul.mubr.bf16.gmra.mrb[0].mxu0 %v475
        %v615 = vpop.f32.mrb[0].mxu0
        %v616 = vadd.f32 %v499, %v615
        %v617 = vpop.f32.mrb[0].mxu0
        %v618 = vpop.f32.mrb[0].mxu0
        %v619 = vadd.f32 %v499, %v618
        %v620 = vpop.f32.mrb[0].mxu0
        %621 = vmatprep.mubr.bf16.mxu0 0
        %622 = vmatmul.mubr.bf16.gmra.mrb[0].mxu0 %v476
        %v623 = vpop.f32.mrb[0].mxu0
        %v624 = vadd.f32 %v499, %v623
        %v625 = vpop.f32.mrb[0].mxu0
        %v626 = vpop.f32.mrb[0].mxu0
        %v627 = vadd.f32 %v499, %v626
        %v628 = vpop.f32.mrb[0].mxu0
        %629 = vmatprep.mubr.bf16.mxu0 0
        %630 = vmatmul.mubr.bf16.gmra.mrb[0].mxu0 %v477
        %v631 = vpop.f32.mrb[0].mxu0
        %v632 = vadd.f32 %v499, %v631
        %v633 = vpop.f32.mrb[0].mxu0
        %v634 = vpop.f32.mrb[0].mxu0
        %v635 = vpop.f32.mrb[0].mxu0
        %636 = vdwg.mxu0
        %v637 = vmax.f32 %v584, 0.0
        %v638 = vmax.f32 %v587, 0.0
        %v639 = vmax.f32 %v592, 0.0
        %v640 = vmax.f32 %v595, 0.0
        %v641 = vmax.f32 %v600, 0.0
        %v642 = vmax.f32 %v603, 0.0
        %v643 = vmax.f32 %v608, 0.0
        %v644 = vmax.f32 %v611, 0.0
        %v645 = vmax.f32 %v616, 0.0
        %v646 = vmax.f32 %v619, 0.0
        %v647 = vmax.f32 %v624, 0.0
        %v648 = vmax.f32 %v627, 0.0
        %v649 = vmax.f32 %v632, 0.0
        %v650 = vpack.c.bf16 %v638, %v637
        %v651 = vpack.c.bf16 %v640, %v639
        %v652 = vpack.c.bf16 %v642, %v641
        %v653 = vpack.c.bf16 %v644, %v643
        %v654 = vpack.c.bf16 %v646, %v645
        %v655 = vpack.c.bf16 %v648, %v647
        %v656 = vpack.c.bf16 %v649, %v649
        %v657 = vld [vmem:[%s5] sm:$0xf]
        %v658 = vld [vmem:[%s5 + $0x4] sm:$0xf]
        %v659 = vld [vmem:[%s5 + $0x8] sm:$0xf]
        %v660 = vld [vmem:[%s5 + $0xc] sm:$0xf]
        %v661 = vld [vmem:[%s5 + $0x10] sm:$0xf]
        %v662 = vld [vmem:[%s5 + $0x14] sm:$0xf]
        %v663 = vld [vmem:[%s5 + $0x18] sm:$0xf]
        %v664 = vld [vmem:[%s5 + $0x1c] sm:$0xf]
        %v665 = vld [vmem:[%s5 + $0x20] sm:$0xf]
        %v666 = vld [vmem:[%s5 + $0x24] sm:$0xf]
        %v667 = vld [vmem:[%s5 + $0x28] sm:$0xf]
        %v668 = vld [vmem:[%s5 + $0x2c] sm:$0xf]
        %v669 = vld [vmem:[%s5 + $0x30] sm:$0xf]
        %v670 = vld [vmem:[%s5 + $0x34] sm:$0xf]
        %v671 = vld [vmem:[%s5 + $0x38] sm:$0xf]
        %v672 = vld [vmem:[%s5 + $0x3c] sm:$0xf]
        %v673 = vld [vmem:[%s6] sm:$0x1]
        %v675 = vlaneseq
        %v676 = vshrl.u32 %v675, 7
        %v677 = vsub.s32 0, %v676
        %v678 = vrot.slane %v673, %v677
        %v696 = vunpack.c.l.b16 %v657
        %v697 = vunpack.c.l.b16 %v658
        %v698 = vunpack.c.l.b16 %v659
        %v699 = vunpack.c.l.b16 %v660
        %v700 = vunpack.c.l.b16 %v661
        %v701 = vunpack.c.l.b16 %v662
        %v702 = vunpack.c.l.b16 %v663
        %v703 = vunpack.c.l.b16 %v664
        %v704 = vunpack.c.l.b16 %v665
        %v705 = vunpack.c.l.b16 %v666
        %v706 = vunpack.c.l.b16 %v667
        %v707 = vunpack.c.l.b16 %v668
        %v708 = vunpack.c.l.b16 %v669
        %v709 = vunpack.c.l.b16 %v670
        %v710 = vunpack.c.l.b16 %v671
        %v711 = vunpack.c.l.b16 %v672
        %v712 = vpack.c.b16 %v697, %v696
        %v713 = vpack.c.b16 %v699, %v698
        %v714 = vpack.c.b16 %v701, %v700
        %v715 = vpack.c.b16 %v703, %v702
        %v716 = vpack.c.b16 %v705, %v704
        %v717 = vpack.c.b16 %v707, %v706
        %v718 = vpack.c.b16 %v709, %v708
        %v719 = vpack.c.b16 %v711, %v710
        %728 = vmatprep.subr.bf16.mxu0 0
        %729 = vmatpush1.bf16.msra.mxu0 %v712
        %730 = vmatprep.subr.bf16.mxu0 0
        %731 = vmatpush1.bf16.msra.mxu0 %v713
        %732 = vmatprep.subr.bf16.mxu0 0
        %733 = vmatpush1.bf16.msra.mxu0 %v714
        %734 = vmatprep.subr.bf16.mxu0 0
        %735 = vmatpush1.bf16.msra.mxu0 %v715
        %736 = vmatprep.subr.bf16.mxu0 0
        %737 = vmatpush1.bf16.msra.mxu0 %v716
        %738 = vmatprep.subr.bf16.mxu0 0
        %739 = vmatpush1.bf16.msra.mxu0 %v717
        %740 = vmatprep.subr.bf16.mxu0 0
        %741 = vmatpush1.bf16.msra.mxu0 %v718
        %742 = vmatprep.subr.bf16.mxu0 0
        %743 = vmatpush1.bf16.msra.mxu0 %v719
        %744 = vmatprep.subr.bf16.mxu0 0
        %745 = vmatpush1.bf16.msra.mxu0 0
        %746 = vmatprep.subr.bf16.mxu0 0
        %747 = vmatpush1.bf16.msra.mxu0 0
        %748 = vmatprep.subr.bf16.mxu0 0
        %749 = vmatpush1.bf16.msra.mxu0 0
        %750 = vmatprep.subr.bf16.mxu0 0
        %751 = vmatpush1.bf16.msra.mxu0 0
        %752 = vmatprep.subr.bf16.mxu0 0
        %753 = vmatpush1.bf16.msra.mxu0 0
        %754 = vmatprep.subr.bf16.mxu0 0
        %755 = vmatpush1.bf16.msra.mxu0 0
        %756 = vmatprep.subr.bf16.mxu0 0
        %757 = vmatpush1.bf16.msra.mxu0 0
        %758 = vmatprep.subr.bf16.mxu0 0
        %759 = vmatpush1.bf16.msra.mxu0 0
        %760 = vmatprep.mubr.bf16.mxu0 0
        %761 = vmatmul.mubr.bf16.gmra.mrb[0].mxu0 %v650
        %v762 = vpop.f32.mrb[0].mxu0
        %v763 = vadd.f32 %v678, %v762
        %v764 = vpop.f32.mrb[0].mxu0
        %v765 = vpop.f32.mrb[0].mxu0
        %v766 = vadd.f32 %v678, %v765
        %v767 = vpop.f32.mrb[0].mxu0
        %768 = vmatprep.mubr.bf16.mxu0 0
        %769 = vmatmul.mubr.bf16.gmra.mrb[0].mxu0 %v651
        %v770 = vpop.f32.mrb[0].mxu0
        %v771 = vadd.f32 %v678, %v770
        %v772 = vpop.f32.mrb[0].mxu0
        %v773 = vpop.f32.mrb[0].mxu0
        %v774 = vadd.f32 %v678, %v773
        %v775 = vpop.f32.mrb[0].mxu0
        %776 = vmatprep.mubr.bf16.mxu0 0
        %777 = vmatmul.mubr.bf16.gmra.mrb[0].mxu0 %v652
        %v778 = vpop.f32.mrb[0].mxu0
        %v779 = vadd.f32 %v678, %v778
        %v780 = vpop.f32.mrb[0].mxu0
        %v781 = vpop.f32.mrb[0].mxu0
        %v782 = vadd.f32 %v678, %v781
        %v783 = vpop.f32.mrb[0].mxu0
        %784 = vmatprep.mubr.bf16.mxu0 0
        %785 = vmatmul.mubr.bf16.gmra.mrb[0].mxu0 %v653
        %v786 = vpop.f32.mrb[0].mxu0
        %v787 = vadd.f32 %v678, %v786
        %v788 = vpop.f32.mrb[0].mxu0
        %v789 = vpop.f32.mrb[0].mxu0
        %v790 = vadd.f32 %v678, %v789
        %v791 = vpop.f32.mrb[0].mxu0
        %792 = vmatprep.mubr.bf16.mxu0 0
        %793 = vmatmul.mubr.bf16.gmra.mrb[0].mxu0 %v654
        %v794 = vpop.f32.mrb[0].mxu0
        %v795 = vadd.f32 %v678, %v794
        %v796 = vpop.f32.mrb[0].mxu0
        %v797 = vpop.f32.mrb[0].mxu0
        %v798 = vadd.f32 %v678, %v797
        %v799 = vpop.f32.mrb[0].mxu0
        %800 = vmatprep.mubr.bf16.mxu0 0
        %801 = vmatmul.mubr.bf16.gmra.mrb[0].mxu0 %v655
        %v802 = vpop.f32.mrb[0].mxu0
        %v803 = vadd.f32 %v678, %v802
        %v804 = vpop.f32.mrb[0].mxu0
        %v805 = vpop.f32.mrb[0].mxu0
        %v806 = vadd.f32 %v678, %v805
        %v807 = vpop.f32.mrb[0].mxu0
        %808 = vmatprep.mubr.bf16.mxu0 0
        %809 = vmatmul.mubr.bf16.gmra.mrb[0].mxu0 %v656
        %v810 = vpop.f32.mrb[0].mxu0
        %v811 = vadd.f32 %v678, %v810
        %v812 = vpop.f32.mrb[0].mxu0
        %v813 = vpop.f32.mrb[0].mxu0
        %v814 = vpop.f32.mrb[0].mxu0
        %815 = vdwg.mxu0
        %816 = vst [vmem:[%s284] sm:$0xff] %v763
        %817 = vst [vmem:[%s284 + $0x8] sm:$0xff] %v766
        %818 = vst [vmem:[%s284 + $0x10] sm:$0xff] %v771
        %819 = vst [vmem:[%s284 + $0x18] sm:$0xff] %v774
        %820 = vst [vmem:[%s284 + $0x20] sm:$0xff] %v779
        %821 = vst [vmem:[%s284 + $0x28] sm:$0xff] %v782
        %822 = vst [vmem:[%s284 + $0x30] sm:$0xff] %v787
        %823 = vst [vmem:[%s284 + $0x38] sm:$0xff] %v790
        %824 = vst [vmem:[%s284 + $0x40] sm:$0xff] %v795
        %825 = vst [vmem:[%s284 + $0x48] sm:$0xff] %v798
        %826 = vst [vmem:[%s284 + $0x50] sm:$0xff] %v803
        %827 = vst [vmem:[%s284 + $0x58] sm:$0xff] %v806
        %828 = vst [vmem:[%s284 + $0x60] sm:$0xff] %v811
        %s829 = sand.u32 %s181, 1
        %s830 = scalar_lea.sflag [#allocation3], %s829
        %s831 = sand.u32 %s181, 1
        %s832 = smul.addr %s831, 104
        %s833 = scalar_lea.vmem [#allocation2], %s832
        // Predicated region
        $region49: #{tpu_custom_call.1} parent=47 // pred_check
          %p834 = pneg %p191
        $region50: #{tpu_custom_call.1} parent=47 // pred_check_branch
          %836 = sbr.rel (%p834) target = $region52
        $region51: #{tpu_custom_call.1} parent=47 // pred_region
          %s837 = smul.u32 13, %s21
          %s838 = ssub.s32 25, %s837
          %p839 = scmp.lt.s32.totalorder %s838, 13
          %s840 = scalar_select %p839, %s838, 13
          %s841 = smul.u32 128, %s840
          %s843 = ssub.s32 1664, %s841
          %844 = vsyncadd %s830, %s843
          %p845 = scmp.ne.s32.totalorder 0, %s841
          %s846 = smul.addr %s837, 128
          %s847 = scalar_lea.hbm %s7, %s846
          %s848 = smul.u32 8, %s840
          %s849 = sshll.u32 %s833, 4
          %s850 = int_to_ptr.vmem [resolvable:$true] %s849
          %s851 = sshll.u32 %s848, 4
          %855 = dma.vmem_to_hbm [thread:$0]  (%p845), %s850, %s851, %s847, %s830, 128, 128, 8
        $region52: #{tpu_custom_call.1} parent=47 // pred_fallthru
          _
      $region48: #{tpu_custom_call.1} parent=5 // pred_fallthru
        _
      %p856 = scmp.le.s32.totalorder 2, %s16
      // Predicated region
      $region53: #{tpu_custom_call.1} parent=5 // pred_check
        %p857 = pneg %p856
      $region54: #{tpu_custom_call.1} parent=5 // pred_check_branch
        %859 = sbr.rel (%p857) target = $region56
      $region55: #{tpu_custom_call.1} parent=5 // pred_region
        %s860 = ssub.s32 %s16, 2
        // Predicated region
        $region57: #{tpu_custom_call.1} parent=55 // pred_check
          %p861 = pneg %p197
        $region58: #{tpu_custom_call.1} parent=55 // pred_check_branch
          %863 = sbr.rel (%p861) target = $region60
        $region59: #{tpu_custom_call.1} parent=55 // pred_region
          %s864 = sand.u32 %s182, 1
          %s865 = scalar_lea.sflag [#allocation3], %s864
          %s866 = sand.u32 %s182, 1
          %s867 = smul.addr %s866, 104
          %s868 = scalar_lea.vmem [#allocation2], %s867
          %869 = dma.done %s865, 1664
        $region60: #{tpu_custom_call.1} parent=55 // pred_fallthru
          _
      $region56: #{tpu_custom_call.1} parent=5 // pred_fallthru
        _
    $region6: #{tpu_custom_call.1} parent=1 // loop_footer
      %s20 = sadd.s32 1, %s16
    $region7: #{tpu_custom_call.1} parent=1 // loop_footer_branch
      %15 = sbr.rel target = $region3
    $region8: #{tpu_custom_call.1} parent=1 // loop_exit
      _
    %870 = vsyncpa [#allocation3], 1
    %s871 = scalar_lea.sflag [#allocation3], 1
    %872 = vsyncpa %s871, 1

</llo_original>
